<compile_context>
chip_gen: v5e
topology: v5e:2x2
jax: 0.10.0
libtpu: 0.0.40
codegen_flags: <defaults>
</compile_context>

<pallas_src>
import jax
import jax.numpy as jnp
from jax.experimental import pallas as pl
from jax.experimental.pallas import tpu as pltpu

IN_FEATURES = 3     # fc1 in_features
HIDDEN = 4          # fc1 out_features / fc2 in_features
OUT_FEATURES = 3    # fc2 out_features

# (3, tile_b) f32 blocks pad to 32*tile_b bytes of VMEM; 65536 lanes
# -> 2 MiB/buffer -> ~8 MiB with double-buffered input+output: safe on every
# generation's default scoped-VMEM limit (v5e 16 MiB, v6e/v7x 32 MiB).
TILE_CAP = 65536


def _round_up(n, m):
    return ((n + m - 1) // m) * m


# -----------------------------------------------------------------------------
# Kernel: out_T = W_eff @ x_T + b_eff, fully unrolled on the VPU (no MXU).
# -----------------------------------------------------------------------------
def fused_affine_kernel(params_ref, xT_ref, oT_ref):
    # params_ref: (12,) f32 in SMEM:
    #             [w00,w01,w02, w10,w11,w12, w20,w21,w22, b0,b1,b2]
    #             where W_eff = w2 @ w1 and b_eff = w2 @ b1 + b2.
    # xT_ref    : (3, tile_b) VMEM -- input transposed (features on sublanes,
    #                                 batch on lanes; lane-dense).
    # oT_ref    : (3, tile_b) VMEM -- output transposed.
    x0 = xT_ref[0:1, :]          # (1, tile_b)
    x1 = xT_ref[1:2, :]
    x2 = xT_ref[2:3, :]

    # 9 scalar*vector MACs + 3 scalar bias adds, all on the VPU.
    row0 = params_ref[0] * x0 + params_ref[1] * x1 + params_ref[2] * x2 + params_ref[9]
    row1 = params_ref[3] * x0 + params_ref[4] * x1 + params_ref[5] * x2 + params_ref[10]
    row2 = params_ref[6] * x0 + params_ref[7] * x1 + params_ref[8] * x2 + params_ref[11]

    oT_ref[0:1, :] = row0.astype(oT_ref.dtype)
    oT_ref[1:2, :] = row1.astype(oT_ref.dtype)
    oT_ref[2:3, :] = row2.astype(oT_ref.dtype)


# -----------------------------------------------------------------------------
# One-time parameter prep (hoisted out of the per-call path).
# -----------------------------------------------------------------------------
def fuse_params(w1, b1, w2, b2):
    """fc2(fc1(x)) == x @ (w2 @ w1)^T + (w2 @ b1 + b2).  Returns a flat (12,)."""
    w_eff = w2 @ w1            # (3, 3)  (out_features, in_features)
    b_eff = w2 @ b1 + b2       # (3,)
    return jnp.concatenate([w_eff.reshape(-1), b_eff]).astype(jnp.float32)


# -----------------------------------------------------------------------------
# Forward wrapper.  (For B of a few hundred or less, a plain
# `x @ w_eff.T + b_eff` XLA op would beat any custom-call dispatch; we always
# take the Pallas path here so the kernel is exercised.)
# -----------------------------------------------------------------------------
@jax.jit
def model_forward(x, params):
    """x: (B, 3); params: (12,) f32 from fuse_params.  Returns (B, 3)."""
    B = x.shape[0]

    # Large tiles to amortize the ~0.35 us per-grid-step overhead; derive from
    # ceil(B/2) so large batches give >= 2 steps (one per v7x TensorCore).
    tile_b = min(TILE_CAP, max(128, _round_up(-(-B // 2), 128)))
    num_tiles = pl.cdiv(B, tile_b)

    # Single layout pass to the lane-dense (features, batch) layout; no
    # explicit zero-pad (ragged final block handled by Pallas).
    xT = x.T                                   # (3, B)

    outT = pl.pallas_call(
        fused_affine_kernel,
        out_shape=jax.ShapeDtypeStruct((OUT_FEATURES, B), x.dtype),
        grid=(num_tiles,),
        in_specs=[
            pl.BlockSpec(memory_space=pltpu.MemorySpace.SMEM),        # params (12,)
            pl.BlockSpec((IN_FEATURES, tile_b), lambda i: (0, i)),    # x_T tile
        ],
        out_specs=pl.BlockSpec((OUT_FEATURES, tile_b), lambda i: (0, i)),
        compiler_params=pltpu.CompilerParams(
            dimension_semantics=("parallel",)),      # shard batch grid on 2 TCs (v7x)
        cost_estimate=pl.CostEstimate(
            flops=21 * B,                            # 9 mul + 9 add + 3 bias per row
            transcendentals=0,
            bytes_accessed=2 * OUT_FEATURES * B * 4 + 48),
    )(params, xT)

    return outT.T                                # back to (B, 3)


if __name__ == "__main__":
    key = jax.random.PRNGKey(0)
    kx, k1, k2, k3, k4, kx2 = jax.random.split(key, 6)

    # PyTorch Linear storage layout: weight is (out_features, in_features).
    w1 = jax.random.normal(k1, (HIDDEN, IN_FEATURES), dtype=jnp.float32) * 0.5
    b1 = jax.random.normal(k2, (HIDDEN,), dtype=jnp.float32) * 0.1
    w2 = jax.random.normal(k3, (OUT_FEATURES, HIDDEN), dtype=jnp.float32) * 0.5
    b2 = jax.random.normal(k4, (OUT_FEATURES,), dtype=jnp.float32) * 0.1

    params = fuse_params(w1, b1, w2, b2)

    def reference(x):
        return (x @ w1.T + b1) @ w2.T + b2

    # Small batch (single ragged tile).
    B = 8
    x = jax.random.normal(kx, (B, IN_FEATURES), dtype=jnp.float32)
    out = jax.block_until_ready(model_forward(x, params))
    assert out.shape == (B, OUT_FEATURES)
    assert jnp.allclose(out, reference(x), atol=1e-5, rtol=1e-5), "mismatch (B=8)"

    # Larger batch: exercises the 2-step grid + ragged final block.
    B2 = 1000
    x2 = jax.random.normal(kx2, (B2, IN_FEATURES), dtype=jnp.float32)
    out2 = jax.block_until_ready(model_forward(x2, params))
    assert out2.shape == (B2, OUT_FEATURES)
    assert jnp.allclose(out2, reference(x2), atol=1e-5, rtol=1e-5), "mismatch (B=1000)"

    print("KERNEL_OK")
</pallas_src>

<mosaic_0001>
module attributes {stable_mosaic.version = 11 : i64} {
  func.func @fused_affine_kernel(%arg0: i32, %arg1: memref<12xf32, #tpu.memory_space<smem>>, %arg2: memref<3x128xf32, #tpu.memory_space<vmem>>, %arg3: memref<3x128xf32, #tpu.memory_space<vmem>>) attributes {dimension_semantics = [#tpu.dimension_semantics<parallel>], iteration_bounds = array<i64: 1>, scalar_prefetch = 0 : i64, scratch_operands = 0 : i64, tpu.core_type = #tpu.core_type<tc>, window_params = [{transform_indices = @transform_0, window_bounds = array<i64: 12>}, {transform_indices = @transform_1, window_bounds = array<i64: 3, 128>}, {transform_indices = @transform_2, window_bounds = array<i64: 3, 128>}]} {
    %c0 = arith.constant 0 : index
    %c0_0 = arith.constant 0 : index
    %0 = vector.load %arg2[%c0, %c0_0] : memref<3x128xf32, #tpu.memory_space<vmem>>, vector<1x128xf32>
    %c1 = arith.constant 1 : index
    %c0_1 = arith.constant 0 : index
    %1 = vector.load %arg2[%c1, %c0_1] : memref<3x128xf32, #tpu.memory_space<vmem>>, vector<1x128xf32>
    %c2 = arith.constant 2 : index
    %c0_2 = arith.constant 0 : index
    %2 = vector.load %arg2[%c2, %c0_2] : memref<3x128xf32, #tpu.memory_space<vmem>>, vector<1x128xf32>
    %c0_3 = arith.constant 0 : index
    %3 = memref.load %arg1[%c0_3] : memref<12xf32, #tpu.memory_space<smem>>
    %4 = vector.broadcast %3 : f32 to vector<1x128xf32>
    %5 = arith.mulf %4, %0 : vector<1x128xf32>
    %c1_4 = arith.constant 1 : index
    %6 = memref.load %arg1[%c1_4] : memref<12xf32, #tpu.memory_space<smem>>
    %7 = vector.broadcast %6 : f32 to vector<1x128xf32>
    %8 = arith.mulf %7, %1 : vector<1x128xf32>
    %9 = arith.addf %5, %8 : vector<1x128xf32>
    %c2_5 = arith.constant 2 : index
    %10 = memref.load %arg1[%c2_5] : memref<12xf32, #tpu.memory_space<smem>>
    %11 = vector.broadcast %10 : f32 to vector<1x128xf32>
    %12 = arith.mulf %11, %2 : vector<1x128xf32>
    %13 = arith.addf %9, %12 : vector<1x128xf32>
    %c9 = arith.constant 9 : index
    %14 = memref.load %arg1[%c9] : memref<12xf32, #tpu.memory_space<smem>>
    %15 = vector.broadcast %14 : f32 to vector<1x128xf32>
    %16 = arith.addf %13, %15 : vector<1x128xf32>
    %c3 = arith.constant 3 : index
    %17 = memref.load %arg1[%c3] : memref<12xf32, #tpu.memory_space<smem>>
    %18 = vector.broadcast %17 : f32 to vector<1x128xf32>
    %19 = arith.mulf %18, %0 : vector<1x128xf32>
    %c4 = arith.constant 4 : index
    %20 = memref.load %arg1[%c4] : memref<12xf32, #tpu.memory_space<smem>>
    %21 = vector.broadcast %20 : f32 to vector<1x128xf32>
    %22 = arith.mulf %21, %1 : vector<1x128xf32>
    %23 = arith.addf %19, %22 : vector<1x128xf32>
    %c5 = arith.constant 5 : index
    %24 = memref.load %arg1[%c5] : memref<12xf32, #tpu.memory_space<smem>>
    %25 = vector.broadcast %24 : f32 to vector<1x128xf32>
    %26 = arith.mulf %25, %2 : vector<1x128xf32>
    %27 = arith.addf %23, %26 : vector<1x128xf32>
    %c10 = arith.constant 10 : index
    %28 = memref.load %arg1[%c10] : memref<12xf32, #tpu.memory_space<smem>>
    %29 = vector.broadcast %28 : f32 to vector<1x128xf32>
    %30 = arith.addf %27, %29 : vector<1x128xf32>
    %c6 = arith.constant 6 : index
    %31 = memref.load %arg1[%c6] : memref<12xf32, #tpu.memory_space<smem>>
    %32 = vector.broadcast %31 : f32 to vector<1x128xf32>
    %33 = arith.mulf %32, %0 : vector<1x128xf32>
    %c7 = arith.constant 7 : index
    %34 = memref.load %arg1[%c7] : memref<12xf32, #tpu.memory_space<smem>>
    %35 = vector.broadcast %34 : f32 to vector<1x128xf32>
    %36 = arith.mulf %35, %1 : vector<1x128xf32>
    %37 = arith.addf %33, %36 : vector<1x128xf32>
    %c8 = arith.constant 8 : index
    %38 = memref.load %arg1[%c8] : memref<12xf32, #tpu.memory_space<smem>>
    %39 = vector.broadcast %38 : f32 to vector<1x128xf32>
    %40 = arith.mulf %39, %2 : vector<1x128xf32>
    %41 = arith.addf %37, %40 : vector<1x128xf32>
    %c11 = arith.constant 11 : index
    %42 = memref.load %arg1[%c11] : memref<12xf32, #tpu.memory_space<smem>>
    %43 = vector.broadcast %42 : f32 to vector<1x128xf32>
    %44 = arith.addf %41, %43 : vector<1x128xf32>
    %c0_6 = arith.constant 0 : index
    %c0_7 = arith.constant 0 : index
    %45 = vector.load %arg3[%c0_6, %c0_7] : memref<3x128xf32, #tpu.memory_space<vmem>>, vector<1x128xf32>
    tpu.vector_store %arg3[%c0_6, %c0_7], %16 {strides = array<i32>} : memref<3x128xf32, #tpu.memory_space<vmem>>, vector<1x128xf32>,
    %c1_8 = arith.constant 1 : index
    %c0_9 = arith.constant 0 : index
    %46 = vector.load %arg3[%c1_8, %c0_9] : memref<3x128xf32, #tpu.memory_space<vmem>>, vector<1x128xf32>
    tpu.vector_store %arg3[%c1_8, %c0_9], %30 {strides = array<i32>} : memref<3x128xf32, #tpu.memory_space<vmem>>, vector<1x128xf32>,
    %c2_10 = arith.constant 2 : index
    %c0_11 = arith.constant 0 : index
    %47 = vector.load %arg3[%c2_10, %c0_11] : memref<3x128xf32, #tpu.memory_space<vmem>>, vector<1x128xf32>
    tpu.vector_store %arg3[%c2_10, %c0_11], %44 {strides = array<i32>} : memref<3x128xf32, #tpu.memory_space<vmem>>, vector<1x128xf32>,
    return
  }
  func.func @transform_0(%arg0: i32) -> i32 {
    %c0_i32 = arith.constant 0 : i32
    %c0_i32_0 = arith.constant 0 : i32
    return %c0_i32 : i32
  }
  func.func @transform_1(%arg0: i32) -> (i32, i32) {
    %c0_i32 = arith.constant 0 : i32
    %c0_i32_0 = arith.constant 0 : i32
    return %c0_i32, %arg0 : i32, i32
  }
  func.func @transform_2(%arg0: i32) -> (i32, i32) {
    %c0_i32 = arith.constant 0 : i32
    %c0_i32_0 = arith.constant 0 : i32
    return %c0_i32, %arg0 : i32, i32
  }
}

</mosaic_0001>

<llo_original>
// kernel: model_forward.1
$region0: #{model_forward.1}
  #allocation0 [shape = 'u32[]', space=smem, size = 0x4, offset = 0x4, fixed_abs, tag = 'smem constant byte address 0x4 - core index']
  #allocation1 [shape = 'u32[72,128]{1,0:T(1,128)}', space=vmem, size = 0x9000, scoped, tag = 'internal scratch']
  %s0 = inlined_call_operand.vmem [shape: f32[12], index: 0, kind: input, shape index: {}]
  %s1 = inlined_call_operand.hbm [shape: f32[3,8], index: 1, kind: input, shape index: {}]
  %s2 = inlined_call_operand.hbm [shape: f32[3,8], index: 2, kind: output, shape index: {}]
  %s3 = sld [smem:[#allocation0]]
  $region26: #{model_forward.1} parent=0
    _
  %s5 = ssub.s32 1, %s3
  %s6 = scalar_select 0, %s5, %s3
  $region1: #{model_forward.1} parent=0
    #allocation2 [shape = 'u8[512]{0}', space=smem, size = 0x200, scoped, tag = 'input window, operand 0, single buffered']
    #allocation3 [shape = 's32[1]{0}', space=sflag, size = 0x4, scoped, tag = 'scoped memory for model_forward.1']
    #allocation4 [shape = 's32[1]{0}', space=sflag, size = 0x4, scoped, tag = 'scoped memory for model_forward.1']
    #allocation5 [shape = 's32[1]{0}', space=sflag, size = 0x4, scoped, tag = 'scoped memory for model_forward.1']
    #allocation6 [shape = 'u8[2048]{0}', space=vmem, size = 0x800, scoped, tag = 'input window, operand 1, single buffered']
    #allocation7 [shape = 'u8[2048]{0}', space=vmem, size = 0x800, scoped, tag = 'output window, operand 0, single buffered']
    %7 = vsyncpa [#allocation5], 0
    %8 = vsyncpa [#allocation3], 0
    %9 = vsyncpa [#allocation4], 0
    // Predicated region
    $region2: #{model_forward.1} parent=1 // pred_check
      _
    $region3: #{model_forward.1} parent=1 // pred_check_branch
      %11 = sbr.rel (0) target = $region5
    $region4: #{model_forward.1} parent=1 // pred_region
      %13 = vsyncadd [#allocation5], 0
      %s15 = sshll.u32 %s0, 4
      %s16 = int_to_ptr.vmem [resolvable:$true] %s15
      %18 = dma.vmem_to_smem %s16, 16, [#allocation2], [#allocation5]
    $region5: #{model_forward.1} parent=1 // pred_fallthru
      _
    // Predicated region
    $region6: #{model_forward.1} parent=1 // pred_check
      _
    $region7: #{model_forward.1} parent=1 // pred_check_branch
      %20 = sbr.rel (0) target = $region9
    $region8: #{model_forward.1} parent=1 // pred_region
      %22 = vsyncadd [#allocation3], 0
      %s24 = sshll.u32 %s1, 4
      %s25 = int_to_ptr.hbm [resolvable:$true] %s24
      %s26 = sshll.u32 [#allocation6], 4
      %s27 = int_to_ptr.vmem [resolvable:$true] %s26
      %29 = dma.hbm_to_vmem [thread:$0]  %s25, 64, %s27, [#allocation3]
    $region9: #{model_forward.1} parent=1 // pred_fallthru
      _
    // Predicated region
    $region10: #{model_forward.1} parent=1 // pred_check
      _
    $region11: #{model_forward.1} parent=1 // pred_check_branch
      %31 = sbr.rel (0) target = $region13
    $region12: #{model_forward.1} parent=1 // pred_region
      %33 = dma.done [#allocation5], 16
    $region13: #{model_forward.1} parent=1 // pred_fallthru
      _
    // Predicated region
    $region14: #{model_forward.1} parent=1 // pred_check
      _
    $region15: #{model_forward.1} parent=1 // pred_check_branch
      %35 = sbr.rel (0) target = $region17
    $region16: #{model_forward.1} parent=1 // pred_region
      %37 = dma.done [#allocation3], 64
    $region17: #{model_forward.1} parent=1 // pred_fallthru
      _
    %38 = sfence
    %v39 = vld [vmem:[#allocation6] sm:$0x1]
    %v40 = vld [vmem:[#allocation6 + $0x1] sm:$0x1]
    %v41 = vld [vmem:[#allocation6 + $0x2] sm:$0x1]
    %s42 = sld [smem:[#allocation2]]
    %v43 = vstv %s42
    %v44 = vmul.f32 %v43, %v39
    %s45 = sld [smem:[#allocation2 + $0x1]]
    %v46 = vstv %s45
    %v47 = vmul.f32 %v46, %v40
    %v48 = vadd.f32 %v44, %v47
    %s49 = sld [smem:[#allocation2 + $0x2]]
    %v50 = vstv %s49
    %v51 = vmul.f32 %v50, %v41
    %v52 = vadd.f32 %v48, %v51
    %s53 = sld [smem:[#allocation2 + $0x9]]
    %v54 = vstv %s53
    %v55 = vadd.f32 %v52, %v54
    %s56 = sld [smem:[#allocation2 + $0x3]]
    %v57 = vstv %s56
    %v58 = vmul.f32 %v57, %v39
    %s59 = sld [smem:[#allocation2 + $0x4]]
    %v60 = vstv %s59
    %v61 = vmul.f32 %v60, %v40
    %v62 = vadd.f32 %v58, %v61
    %s63 = sld [smem:[#allocation2 + $0x5]]
    %v64 = vstv %s63
    %v65 = vmul.f32 %v64, %v41
    %v66 = vadd.f32 %v62, %v65
    %s67 = sld [smem:[#allocation2 + $0xa]]
    %v68 = vstv %s67
    %v69 = vadd.f32 %v66, %v68
    %s70 = sld [smem:[#allocation2 + $0x6]]
    %v71 = vstv %s70
    %v72 = vmul.f32 %v71, %v39
    %s73 = sld [smem:[#allocation2 + $0x7]]
    %v74 = vstv %s73
    %v75 = vmul.f32 %v74, %v40
    %v76 = vadd.f32 %v72, %v75
    %s77 = sld [smem:[#allocation2 + $0x8]]
    %v78 = vstv %s77
    %v79 = vmul.f32 %v78, %v41
    %v80 = vadd.f32 %v76, %v79
    %s81 = sld [smem:[#allocation2 + $0xb]]
    %v82 = vstv %s81
    %v83 = vadd.f32 %v80, %v82
    %84 = vst [vmem:[#allocation7] sm:$0x1] %v55
    %85 = vst [vmem:[#allocation7 + $0x1] sm:$0x1] %v69
    %86 = vst [vmem:[#allocation7 + $0x2] sm:$0x1] %v83
    // Predicated region
    $region18: #{model_forward.1} parent=1 // pred_check
      _
    $region19: #{model_forward.1} parent=1 // pred_check_branch
      %88 = sbr.rel (0) target = $region21
    $region20: #{model_forward.1} parent=1 // pred_region
      %90 = vsyncadd [#allocation4], 0
      %s92 = sshll.u32 [#allocation7], 4
      %s93 = int_to_ptr.vmem [resolvable:$true] %s92
      %s94 = sshll.u32 %s2, 4
      %s95 = int_to_ptr.hbm [resolvable:$true] %s94
      %97 = dma.vmem_to_hbm [thread:$0]  %s93, 64, %s95, [#allocation4]
    $region21: #{model_forward.1} parent=1 // pred_fallthru
      _
    // Predicated region
    $region22: #{model_forward.1} parent=1 // pred_check
      _
    $region23: #{model_forward.1} parent=1 // pred_check_branch
      %99 = sbr.rel (0) target = $region25
    $region24: #{model_forward.1} parent=1 // pred_region
      %101 = dma.done [#allocation4], 64
    $region25: #{model_forward.1} parent=1 // pred_fallthru
      _
    %102 = vsyncpa [#allocation3], 1
    %103 = vsyncpa [#allocation4], 1
    %104 = vsyncpa [#allocation5], 1

</llo_original>
